<compile_context>
chip_gen: v7x
topology: tpu7x:2x2x1
jax: 0.10.0
libtpu: 0.0.40
codegen_flags: <defaults>
</compile_context>

<pallas_src>
import functools

import jax
import jax.numpy as jnp
from jax.experimental import pallas as pl
from jax.experimental.pallas import tpu as pltpu


def _round_up(x, m):
    return ((x + m - 1) // m) * m


def _pos_emb_kernel(tgt_ref, tab_ref, out_ref, *, group):
    # tgt_ref: (T, 2G) int32 -- pre-shifted one-hot column targets:
    #            tgt[:, g]       in [g*V,         g*V + max_w)   (x-embedding row)
    #            tgt[:, G + g]   in [g*V + max_w, (g+1)*V)       (y-embedding row)
    # tab_ref: (G*V, G*D)    -- block-diagonal of G copies of the fused (V, D) table
    # out_ref: (T, G*D)      -- lane-dense output block
    T = tgt_ref.shape[0]
    GV = tab_ref.shape[0]
    ftype = tab_ref.dtype

    # Hoisted once per grid step.
    col = jax.lax.broadcasted_iota(jnp.int32, (T, GV), 1)

    # One-hot row r has ones at the two target columns of every group.  Targets of
    # different groups / halves live in disjoint column ranges, so OR-accumulation is exact.
    hit = None
    for g in range(group):
        h = (col == tgt_ref[:, g : g + 1]) | (col == tgt_ref[:, group + g : group + g + 1])
        hit = h if hit is None else (hit | h)

    # Single MXU pass yields the already-concatenated (and group-packed) embeddings.
    # Each output element receives exactly one 0/1-weighted term, so this is exact.
    out_ref[...] = jnp.dot(
        hit.astype(ftype), tab_ref[...], preferred_element_type=jnp.float32
    ).astype(out_ref.dtype)


@functools.partial(jax.jit, static_argnames=("tile_rows", "group", "force_kernel"))
def positional_embedding(
    pixel_coordinates, x_table, y_table, *, tile_rows=None, group=None, force_kernel=False
):
    """pixel_coordinates: (B, N, 2) integer coords; returns (B, N, 2*(D//2)) embeddings."""
    B, N, _ = pixel_coordinates.shape
    max_w, D2 = x_table.shape
    max_h = y_table.shape[0]
    D = 2 * D2
    V = max_w + max_h
    M = B * N
    out_dtype = x_table.dtype
    itemsize = jnp.dtype(out_dtype).itemsize

    # Clamp coordinates: identical to nn.Embedding for valid inputs; out-of-range values
    # (which would raise in PyTorch) are clamped instead of corrupting a neighbouring
    # packed output row.
    cx_full = jnp.clip(pixel_coordinates[..., 0].astype(jnp.int32), 0, max_w - 1)
    cy_full = jnp.clip(pixel_coordinates[..., 1].astype(jnp.int32), 0, max_h - 1)

    # Small-problem fallback: kernel launch/DMA overhead dominates below ~64K output elems.
    if not force_kernel and M * D < 65536:
        return jnp.concatenate(
            [jnp.take(x_table, cx_full, axis=0), jnp.take(y_table, cy_full, axis=0)],
            axis=-1,
        ).astype(out_dtype)

    # --- Group G coordinate rows per output row so the output last dim is lane-dense. ---
    if group is None:
        if D >= 128:
            G = 1
        else:
            G = max(1, 128 // D)
            for cand in range(1, 17):                 # smallest G with G*D % 128 == 0
                if (cand * D) % 128 == 0:
                    G = cand
                    break
        # Keep the (G*V, G*D) grouped table small -- it is double-buffered by the pipeline.
        while G > 1 and (G * V) * (G * D) * itemsize > (2 << 20):
            G = max(1, G // 2)
    else:
        G = max(1, int(group))
    # TODO(synk): for very large vocabularies (V >= ~2k) switch to per-group (T,V)x(V,D)
    # matmuls or a DMA-gather path instead of the block-diagonal one-hot matmul.

    sub = {1: 32, 2: 16, 4: 8}.get(itemsize, 8)       # sublane multiple for the table dtype
    Mg = pl.cdiv(M, G)                                # grouped rows needed to cover M

    # --- Tile sizing: ~1 MiB output block/step, bounded one-hot scratch, >=4 grid steps. --
    if tile_rows is None:
        t_bytes = max(1, (1 << 20) // (G * D * itemsize))    # ~1 MiB output block
        t_work = max(1, (4 << 20) // (G * V * 8))            # onehot(f32)+col(i32) <= 4 MiB
        t_par = pl.cdiv(Mg, 4)                               # keep >= 4 steps for 2 TCs
        tile_rows = max(sub, min(t_bytes, t_work, t_par))
    T = _round_up(min(tile_rows, _round_up(Mg, sub)), sub)
    Mg_pad = _round_up(Mg, T)
    M_pad = Mg_pad * G

    # --- Padded, grouped, pre-shifted one-hot column targets: single (Mg_pad, 2G) input. --
    cx = cx_full.reshape(M)
    cy = cy_full.reshape(M)
    if M_pad != M:
        cx = jnp.pad(cx, (0, M_pad - M))              # padded rows pick row 0; sliced off
        cy = jnp.pad(cy, (0, M_pad - M))
    shift = jnp.arange(G, dtype=jnp.int32) * V
    tgt = jnp.concatenate(
        [cx.reshape(Mg_pad, G) + shift, cy.reshape(Mg_pad, G) + shift + max_w], axis=1
    )

    # --- Fused block-diagonal table. -----------------------------------------------------
    # TODO(synk): in production build the fused/kron table once as a module parameter (it is
    # a pure function of the embedding weights) instead of re-materializing it per call.
    fused = jnp.zeros((V, D), out_dtype)
    fused = fused.at[:max_w, :D2].set(x_table.astype(out_dtype))
    fused = fused.at[max_w:, D2:].set(y_table.astype(out_dtype))
    table = fused if G == 1 else jnp.kron(jnp.eye(G, dtype=out_dtype), fused)

    # --- VMEM budget sized to the actual footprint (plus headroom), v7x-safe. -------------
    table_bytes = 2 * table.size * itemsize           # resident table, double-buffered
    out_bytes = 2 * T * G * D * itemsize              # output block, double-buffered
    tgt_bytes = 2 * T * 128 * 4                       # (T, 2G) int32, lanes pad to 128
    work_bytes = T * G * V * (4 + 4 + 2)              # onehot f32 + col i32 + bool slack
    footprint = table_bytes + out_bytes + tgt_bytes + work_bytes
    vmem_limit = int(min(48 << 20, max(16 << 20, footprint + (8 << 20))))

    kernel = functools.partial(_pos_emb_kernel, group=G)

    out = pl.pallas_call(
        kernel,
        out_shape=jax.ShapeDtypeStruct((Mg_pad, G * D), out_dtype),
        grid_spec=pltpu.PrefetchScalarGridSpec(
            num_scalar_prefetch=0,
            grid=(Mg_pad // T,),
            in_specs=[
                pl.BlockSpec((T, 2 * G), lambda i: (i, 0)),       # shifted one-hot targets
                pl.BlockSpec(table.shape, lambda i: (0, 0)),      # resident fused table
                # TODO(synk): single-buffer the resident table (pipeline_mode=pl.Buffered(1))
                # once buffer_count=1 is supported, halving its VMEM footprint on v7x.
            ],
            out_specs=pl.BlockSpec((T, G * D), lambda i: (i, 0)),
        ),
        compiler_params=pltpu.CompilerParams(
            # M axis is embarrassingly parallel -> v7x can shard grid steps across both TCs.
            dimension_semantics=("parallel",),
            vmem_limit_bytes=vmem_limit,
        ),
    )(tgt, table)

    # (Mg_pad, G*D) -> (M_pad, D) recovers row-major coordinate order exactly.
    # TODO(synk): if the consumer can accept the packed (Mg, G*D) layout, return it directly
    # to avoid a possible XLA relayout of the (M, D) view when D < 128.
    return out.reshape(M_pad, D)[:M].reshape(B, N, D)


if __name__ == "__main__":
    # Small shapes consistent with the module's forward.
    max_width = 16
    max_height = 16
    embedding_dim = 32
    batch = 2
    num_points = 8

    key = jax.random.PRNGKey(0)
    k_x, k_y, k_c = jax.random.split(key, 3)

    # nn.Embedding default init: N(0, 1)
    x_table = jax.random.normal(k_x, (max_width, embedding_dim // 2), dtype=jnp.float32)
    y_table = jax.random.normal(k_y, (max_height, embedding_dim // 2), dtype=jnp.float32)

    pixel_coordinates = jax.random.randint(
        k_c, (batch, num_points, 2), 0, max_width, dtype=jnp.int32
    )

    def ref_fn(coords, xt, yt):
        return jnp.concatenate([xt[coords[..., 0]], yt[coords[..., 1]]], axis=-1)

    # 1) Pallas kernel path (forced past the small-problem fallback).
    out = positional_embedding(pixel_coordinates, x_table, y_table, force_kernel=True)
    out = jax.block_until_ready(out)
    assert out.shape == (batch, num_points, embedding_dim)
    assert jnp.allclose(out, ref_fn(pixel_coordinates, x_table, y_table), atol=1e-6), \
        "kernel mismatch"

    # 2) Multi-tile grid (>= 4 steps) + row padding path.
    big_coords = jax.random.randint(
        jax.random.PRNGKey(1), (2, 1000, 2), 0, max_width, dtype=jnp.int32
    )
    out_big = jax.block_until_ready(
        positional_embedding(big_coords, x_table, y_table, force_kernel=True)
    )
    assert jnp.allclose(out_big, ref_fn(big_coords, x_table, y_table), atol=1e-6), \
        "big kernel mismatch"

    # 3) bf16 tables (exercises the 16-sublane rounding path; one-hot selection is exact).
    x_bf16 = x_table.astype(jnp.bfloat16)
    y_bf16 = y_table.astype(jnp.bfloat16)
    out_bf16 = jax.block_until_ready(
        positional_embedding(big_coords, x_bf16, y_bf16, force_kernel=True)
    )
    assert out_bf16.dtype == jnp.bfloat16
    assert jnp.allclose(
        out_bf16.astype(jnp.float32),
        ref_fn(big_coords, x_bf16, y_bf16).astype(jnp.float32),
        atol=0.0,
    ), "bf16 kernel mismatch"

    # 4) Small-problem XLA fallback path.
    out_small = jax.block_until_ready(
        positional_embedding(pixel_coordinates, x_table, y_table)
    )
    assert jnp.allclose(out_small, ref_fn(pixel_coordinates, x_table, y_table), atol=1e-6), \
        "fallback mismatch"

    print("KERNEL_OK")
</pallas_src>

<mosaic_0001>
module attributes {stable_mosaic.version = 11 : i64} {
  func.func @_pos_emb_kernel(%arg0: i32, %arg1: memref<8x8xi32, #tpu.memory_space<vmem>>, %arg2: memref<128x128xf32, #tpu.memory_space<vmem>>, %arg3: memref<8x128xf32, #tpu.memory_space<vmem>>) attributes {dimension_semantics = [#tpu.dimension_semantics<parallel>], iteration_bounds = array<i64: 1>, scalar_prefetch = 0 : i64, scratch_operands = 0 : i64, tpu.core_type = #tpu.core_type<tc>, window_params = [{transform_indices = @transform_0, window_bounds = array<i64: 8, 8>}, {pipeline_mode = #tpu.pipeline_mode<synchronous>, transform_indices = @transform_1, window_bounds = array<i64: 128, 128>}, {transform_indices = @transform_2, window_bounds = array<i64: 8, 128>}]} {
    %0 = tpu.iota {dimensions = array<i32: 1>} : vector<8x128xi32>
    %c0 = arith.constant 0 : index
    %c0_0 = arith.constant 0 : index
    %1 = vector.load %arg1[%c0, %c0_0] : memref<8x8xi32, #tpu.memory_space<vmem>>, vector<8x1xi32>
    %2 = vector.broadcast %1 : vector<8x1xi32> to vector<8x128xi32>
    %3 = arith.cmpi eq, %0, %2 : vector<8x128xi32>
    %c0_1 = arith.constant 0 : index
    %c4 = arith.constant 4 : index
    %4 = vector.load %arg1[%c0_1, %c4] : memref<8x8xi32, #tpu.memory_space<vmem>>, vector<8x1xi32>
    %5 = vector.broadcast %4 : vector<8x1xi32> to vector<8x128xi32>
    %6 = arith.cmpi eq, %0, %5 : vector<8x128xi32>
    %7 = arith.ori %3, %6 : vector<8x128xi1>
    %c0_2 = arith.constant 0 : index
    %c1 = arith.constant 1 : index
    %8 = vector.load %arg1[%c0_2, %c1] : memref<8x8xi32, #tpu.memory_space<vmem>>, vector<8x1xi32>
    %9 = vector.broadcast %8 : vector<8x1xi32> to vector<8x128xi32>
    %10 = arith.cmpi eq, %0, %9 : vector<8x128xi32>
    %c0_3 = arith.constant 0 : index
    %c5 = arith.constant 5 : index
    %11 = vector.load %arg1[%c0_3, %c5] : memref<8x8xi32, #tpu.memory_space<vmem>>, vector<8x1xi32>
    %12 = vector.broadcast %11 : vector<8x1xi32> to vector<8x128xi32>
    %13 = arith.cmpi eq, %0, %12 : vector<8x128xi32>
    %14 = arith.ori %10, %13 : vector<8x128xi1>
    %15 = arith.ori %7, %14 : vector<8x128xi1>
    %c0_4 = arith.constant 0 : index
    %c2 = arith.constant 2 : index
    %16 = vector.load %arg1[%c0_4, %c2] : memref<8x8xi32, #tpu.memory_space<vmem>>, vector<8x1xi32>
    %17 = vector.broadcast %16 : vector<8x1xi32> to vector<8x128xi32>
    %18 = arith.cmpi eq, %0, %17 : vector<8x128xi32>
    %c0_5 = arith.constant 0 : index
    %c6 = arith.constant 6 : index
    %19 = vector.load %arg1[%c0_5, %c6] : memref<8x8xi32, #tpu.memory_space<vmem>>, vector<8x1xi32>
    %20 = vector.broadcast %19 : vector<8x1xi32> to vector<8x128xi32>
    %21 = arith.cmpi eq, %0, %20 : vector<8x128xi32>
    %22 = arith.ori %18, %21 : vector<8x128xi1>
    %23 = arith.ori %15, %22 : vector<8x128xi1>
    %c0_6 = arith.constant 0 : index
    %c3 = arith.constant 3 : index
    %24 = vector.load %arg1[%c0_6, %c3] : memref<8x8xi32, #tpu.memory_space<vmem>>, vector<8x1xi32>
    %25 = vector.broadcast %24 : vector<8x1xi32> to vector<8x128xi32>
    %26 = arith.cmpi eq, %0, %25 : vector<8x128xi32>
    %c0_7 = arith.constant 0 : index
    %c7 = arith.constant 7 : index
    %27 = vector.load %arg1[%c0_7, %c7] : memref<8x8xi32, #tpu.memory_space<vmem>>, vector<8x1xi32>
    %28 = vector.broadcast %27 : vector<8x1xi32> to vector<8x128xi32>
    %29 = arith.cmpi eq, %0, %28 : vector<8x128xi32>
    %30 = arith.ori %26, %29 : vector<8x128xi1>
    %31 = arith.ori %23, %30 : vector<8x128xi1>
    %32 = arith.extui %31 : vector<8x128xi1> to vector<8x128xi32>
    %33 = arith.sitofp %32 : vector<8x128xi32> to vector<8x128xf32>
    %c0_8 = arith.constant 0 : index
    %c0_9 = arith.constant 0 : index
    %34 = vector.load %arg2[%c0_8, %c0_9] : memref<128x128xf32, #tpu.memory_space<vmem>>, vector<128x128xf32>
    %cst = arith.constant dense<0.000000e+00> : vector<8x128xf32>
    %35 = tpu.matmul %33, %34, %cst {dimension_numbers = #tpu.dot_dimension_numbers<[1], [0], [0], [1], [0, 0, 1, 1], [], []>} : vector<8x128xf32>, vector<128x128xf32>, vector<8x128xf32> -> vector<8x128xf32>
    %c0_10 = arith.constant 0 : index
    %c0_11 = arith.constant 0 : index
    %36 = vector.load %arg3[%c0_10, %c0_11] : memref<8x128xf32, #tpu.memory_space<vmem>>, vector<8x128xf32>
    tpu.vector_store %arg3[%c0_10, %c0_11], %35 {strides = array<i32>} : memref<8x128xf32, #tpu.memory_space<vmem>>, vector<8x128xf32>,
    return
  }
  func.func @transform_0(%arg0: i32) -> (i32, i32) {
    %c0_i32 = arith.constant 0 : i32
    %c0_i32_0 = arith.constant 0 : i32
    return %arg0, %c0_i32 : i32, i32
  }
  func.func @transform_1(%arg0: i32) -> (i32, i32) {
    %c0_i32 = arith.constant 0 : i32
    %c0_i32_0 = arith.constant 0 : i32
    %c0_i32_1 = arith.constant 0 : i32
    return %c0_i32, %c0_i32_0 : i32, i32
  }
  func.func @transform_2(%arg0: i32) -> (i32, i32) {
    %c0_i32 = arith.constant 0 : i32
    %c0_i32_0 = arith.constant 0 : i32
    return %arg0, %c0_i32 : i32, i32
  }
}

</mosaic_0001>

<llo_original>
// kernel: positional_embedding.1
$region0: #{positional_embedding.1}
  #allocation0 [shape = 'u32[]', space=smem, size = 0x4, offset = 0x4, fixed_abs, tag = 'smem constant byte address 0x4 - core index']
  #allocation1 [shape = 'u32[144,128]{1,0:T(1,128)}', space=vmem, size = 0x12000, scoped, tag = 'internal scratch']
  %s0 = inlined_call_operand.vmem [shape: s32[8,8], index: 0, kind: input, shape index: {}]
  %s1 = inlined_call_operand.vmem [shape: f32[128,128], index: 1, kind: input, shape index: {}]
  %s2 = inlined_call_operand.vmem [shape: f32[8,128], index: 2, kind: output, shape index: {}]
  %s3 = sld [smem:[#allocation0]]
  $region18: #{positional_embedding.1} parent=0
    _
  %s5 = ssub.s32 1, %s3
  %s6 = scalar_select 0, %s5, %s3
  // Predicated region
  $region2: #{positional_embedding.1} parent=0 // pred_check
    _
  $region3: #{positional_embedding.1} parent=0 // pred_check_branch
    %8 = sbr.rel (0) target = $region5
  $region4: #{positional_embedding.1} parent=0 // pred_region
    _
  $region5: #{positional_embedding.1} parent=0 // pred_fallthru
    _
  // Predicated region
  $region6: #{positional_embedding.1} parent=0 // pred_check
    _
  $region7: #{positional_embedding.1} parent=0 // pred_check_branch
    %10 = sbr.rel (0) target = $region9
  $region8: #{positional_embedding.1} parent=0 // pred_region
    _
  $region9: #{positional_embedding.1} parent=0 // pred_fallthru
    _
  %v11 = vlaneseq
  %v12 = vand.u32 %v11, 127
  %v13 = vld [vmem:[%s0] sm:$0xff]
  %14 = vset.pattern.permute.xlu0 0
  %15 = vperm.xlu0 %14, %v13
  %v16 = vpop.permute.xlu0 %15
  %vm17 = vcmp.eq.s32.totalorder %v12, %v16
  %18 = vset.pattern.permute.xlu0 4
  %19 = vperm.xlu0 %18, %v13
  %v20 = vpop.permute.xlu0 %19
  %vm21 = vcmp.eq.s32.totalorder %v12, %v20
  %vm22 = vmor %vm17, %vm21
  %23 = vset.pattern.permute.xlu0 1
  %24 = vperm.xlu0 %23, %v13
  %v25 = vpop.permute.xlu0 %24
  %vm26 = vcmp.eq.s32.totalorder %v12, %v25
  %27 = vset.pattern.permute.xlu0 5
  %28 = vperm.xlu0 %27, %v13
  %v29 = vpop.permute.xlu0 %28
  %vm30 = vcmp.eq.s32.totalorder %v12, %v29
  %vm31 = vmor %vm26, %vm30
  %vm32 = vmor %vm22, %vm31
  %33 = vset.pattern.permute.xlu0 2
  %34 = vperm.xlu0 %33, %v13
  %v35 = vpop.permute.xlu0 %34
  %vm36 = vcmp.eq.s32.totalorder %v12, %v35
  %37 = vset.pattern.permute.xlu0 6
  %38 = vperm.xlu0 %37, %v13
  %v39 = vpop.permute.xlu0 %38
  %vm40 = vcmp.eq.s32.totalorder %v12, %v39
  %vm41 = vmor %vm36, %vm40
  %vm42 = vmor %vm32, %vm41
  %43 = vset.pattern.permute.xlu0 3
  %44 = vperm.xlu0 %43, %v13
  %v45 = vpop.permute.xlu0 %44
  %vm46 = vcmp.eq.s32.totalorder %v12, %v45
  %47 = vset.pattern.permute.xlu0 7
  %48 = vperm.xlu0 %47, %v13
  %v49 = vpop.permute.xlu0 %48
  %vm50 = vcmp.eq.s32.totalorder %v12, %v49
  %vm51 = vmor %vm46, %vm50
  %vm52 = vmor %vm42, %vm51
  %v53 = vsel %vm52, 1, 0
  %v54 = vcvt.s32.f32 %v53
  %v55 = vld [vmem:[%s1] sm:$0xff]
  %v56 = vld [vmem:[%s1 + $0x8] sm:$0xff]
  %v57 = vld [vmem:[%s1 + $0x10] sm:$0xff]
  %v58 = vld [vmem:[%s1 + $0x18] sm:$0xff]
  %v59 = vld [vmem:[%s1 + $0x20] sm:$0xff]
  %v60 = vld [vmem:[%s1 + $0x28] sm:$0xff]
  %v61 = vld [vmem:[%s1 + $0x30] sm:$0xff]
  %v62 = vld [vmem:[%s1 + $0x38] sm:$0xff]
  %v63 = vld [vmem:[%s1 + $0x40] sm:$0xff]
  %v64 = vld [vmem:[%s1 + $0x48] sm:$0xff]
  %v65 = vld [vmem:[%s1 + $0x50] sm:$0xff]
  %v66 = vld [vmem:[%s1 + $0x58] sm:$0xff]
  %v67 = vld [vmem:[%s1 + $0x60] sm:$0xff]
  %v68 = vld [vmem:[%s1 + $0x68] sm:$0xff]
  %v69 = vld [vmem:[%s1 + $0x70] sm:$0xff]
  %v70 = vld [vmem:[%s1 + $0x78] sm:$0xff]
  %71 = vmatprep.subr.mxu0 0.0
  %72 = vmatpush1.msra.mxu0 %v55
  %73 = vmatprep.subr.mxu0 0.0
  %74 = vmatpush1.msra.mxu0 %v56
  %75 = vmatprep.subr.mxu0 0.0
  %76 = vmatpush1.msra.mxu0 %v57
  %77 = vmatprep.subr.mxu0 0.0
  %78 = vmatpush1.msra.mxu0 %v58
  %79 = vmatprep.subr.mxu0 0.0
  %80 = vmatpush1.msra.mxu0 %v59
  %81 = vmatprep.subr.mxu0 0.0
  %82 = vmatpush1.msra.mxu0 %v60
  %83 = vmatprep.subr.mxu0 0.0
  %84 = vmatpush1.msra.mxu0 %v61
  %85 = vmatprep.subr.mxu0 0.0
  %86 = vmatpush1.msra.mxu0 %v62
  %87 = vmatprep.subr.mxu0 0.0
  %88 = vmatpush1.msra.mxu0 %v63
  %89 = vmatprep.subr.mxu0 0.0
  %90 = vmatpush1.msra.mxu0 %v64
  %91 = vmatprep.subr.mxu0 0.0
  %92 = vmatpush1.msra.mxu0 %v65
  %93 = vmatprep.subr.mxu0 0.0
  %94 = vmatpush1.msra.mxu0 %v66
  %95 = vmatprep.subr.mxu0 0.0
  %96 = vmatpush1.msra.mxu0 %v67
  %97 = vmatprep.subr.mxu0 0.0
  %98 = vmatpush1.msra.mxu0 %v68
  %99 = vmatprep.subr.mxu0 0.0
  %100 = vmatpush1.msra.mxu0 %v69
  %101 = vmatprep.subr.mxu0 0.0
  %102 = vmatpush1.msra.mxu0 %v70
  %103 = vmatprep.subr.mxu0 0.0
  %104 = vmatpush1.msra.mxu0 0.0
  %105 = vmatprep.subr.mxu0 0.0
  %106 = vmatpush1.msra.mxu0 0.0
  %107 = vmatprep.subr.mxu0 0.0
  %108 = vmatpush1.msra.mxu0 0.0
  %109 = vmatprep.subr.mxu0 0.0
  %110 = vmatpush1.msra.mxu0 0.0
  %111 = vmatprep.subr.mxu0 0.0
  %112 = vmatpush1.msra.mxu0 0.0
  %113 = vmatprep.subr.mxu0 0.0
  %114 = vmatpush1.msra.mxu0 0.0
  %115 = vmatprep.subr.mxu0 0.0
  %116 = vmatpush1.msra.mxu0 0.0
  %117 = vmatprep.subr.mxu0 0.0
  %118 = vmatpush1.msra.mxu0 0.0
  %119 = vmatprep.subr.mxu0 0.0
  %120 = vmatpush1.msra.mxu0 0.0
  %121 = vmatprep.subr.mxu0 0.0
  %122 = vmatpush1.msra.mxu0 0.0
  %123 = vmatprep.subr.mxu0 0.0
  %124 = vmatpush1.msra.mxu0 0.0
  %125 = vmatprep.subr.mxu0 0.0
  %126 = vmatpush1.msra.mxu0 0.0
  %127 = vmatprep.subr.mxu0 0.0
  %128 = vmatpush1.msra.mxu0 0.0
  %129 = vmatprep.subr.mxu0 0.0
  %130 = vmatpush1.msra.mxu0 0.0
  %131 = vmatprep.subr.mxu0 0.0
  %132 = vmatpush1.msra.mxu0 0.0
  %133 = vmatprep.subr.mxu0 0.0
  %134 = vmatpush1.msra.mxu0 0.0
  %135 = vmatprep.mubr.f32.mxu0 0.0
  %136 = vmatmul.mubr.f32.gmra.mrb[0].mxu0 %v54
  %v137 = vpop.f32.mrb[0].mxu0
  %v138 = vadd.f32 0.0, %v137
  %v139 = vpop.f32.mrb[0].mxu0
  %140 = vdwg.mxu0
  %141 = vst [vmem:[%s2] sm:$0xff] %v138
  // Predicated region
  $region10: #{positional_embedding.1} parent=0 // pred_check
    _
  $region11: #{positional_embedding.1} parent=0 // pred_check_branch
    %143 = sbr.rel (0) target = $region13
  $region12: #{positional_embedding.1} parent=0 // pred_region
    _
  $region13: #{positional_embedding.1} parent=0 // pred_fallthru
    _
  // Predicated region
  $region14: #{positional_embedding.1} parent=0 // pred_check
    _
  $region15: #{positional_embedding.1} parent=0 // pred_check_branch
    %145 = sbr.rel (0) target = $region17
  $region16: #{positional_embedding.1} parent=0 // pred_region
    _
  $region17: #{positional_embedding.1} parent=0 // pred_fallthru
    _

</llo_original>
